<compile_context>
chip_gen: v6e
topology: v6e:2x2x1
jax: 0.10.0
libtpu: 0.0.40
codegen_flags: <defaults>
</compile_context>

<pallas_src>
import functools
import numpy as np
import jax
import jax.numpy as jnp
from jax import lax
from jax.experimental import pallas as pl
from jax.experimental.pallas import tpu as pltpu

_LANE = 128


def _round_up(x, m):
    return (x + m - 1) // m * m


# --------------------------------------------------------------------------
# Pallas kernel: full CNN forward on one (TB, 128) batch tile
# --------------------------------------------------------------------------
def cnn_forward_kernel(x_ref,
                       m1_ref, b1_ref,
                       m2_ref, b2_ref,
                       l1w_ref, l1b_ref,
                       l2wa_ref, l2wb_ref, l2b_ref,
                       hw_ref, hb_ref,
                       out_ref):
    f32 = jnp.float32

    def dot(a, b):
        return jnp.dot(a, b, preferred_element_type=f32)

    def pool_max(h, right, down):
        # 2x2 / stride-1 maxpool computed in the conv output's flat (c, y, x)
        # lane layout: window taps sit at flat offsets {0, right, down, down+right}.
        # pltpu.roll(x, n-k) gives out[i] = x[(i + k) % n]; positions that wrap or
        # cross row/channel boundaries are garbage but the host-folded next-layer
        # weight has zero rows there, so they never contribute.
        n = h.shape[-1]
        r1 = pltpu.roll(h, n - right, axis=1)           # x[i + 1]
        r2 = pltpu.roll(h, n - down, axis=1)            # x[i + W]
        r3 = pltpu.roll(h, n - down - right, axis=1)    # x[i + W + 1]
        return jnp.maximum(jnp.maximum(h, r1), jnp.maximum(r2, r3))

    x = x_ref[...]                                                    # (TB, 128)

    # conv1p (2->6, k3, pad1) as im2col matmul + bias, ReLU  -> conv layout, 256 lanes
    h1 = jnp.maximum(dot(x, m1_ref[...]) + b1_ref[...], 0.0)         # (TB, 256)
    # pool1p via XLU rolls (offsets 1, 7, 8 in the (co,5,7) flat layout)
    p1 = pool_max(h1, right=1, down=7)                               # (TB, 256)

    # conv2p (6->10, k3, pad0); im2col rows indexed directly in p1's layout
    h2 = jnp.maximum(dot(p1, m2_ref[...]) + b2_ref[...], 0.0)        # (TB, 128)
    # pool2p via rolls (offsets 1, 4, 5 in the (co,2,4) flat layout)
    p2 = pool_max(h2, right=1, down=4)                               # (TB, 128)

    # branch_b = relu(linear1p(ob_other)); ob_other lives in lanes 0..28 of x
    bb = jnp.maximum(dot(x, l1w_ref[...]) + l1b_ref[...], 0.0)       # (TB, p0p)

    # cat((pool2, branch_b)) @ linear2p as a split matmul (conv rows folded), ReLU
    h3 = jnp.maximum(dot(p2, l2wa_ref[...]) + dot(bb, l2wb_ref[...])
                     + l2b_ref[...], 0.0)                            # (TB, p1p)

    # fused policy + value head: lane-dense, 128-padded output
    out_ref[...] = dot(h3, hw_ref[...]) + hb_ref[...]                # (TB, 128)


# --------------------------------------------------------------------------
# One-time parameter glue: im2col, pool-compaction fold, transposes, head fuse, pad
# --------------------------------------------------------------------------
def prepare_params(params, policy_out_dim):
    """Host-side, run ONCE per parameter set (kept out of the jitted forward)."""
    w1 = np.asarray(params["w1"], np.float32)    # (6, 2, 3, 3)
    b1 = np.asarray(params["b1"], np.float32)    # (6,)
    w2 = np.asarray(params["w2"], np.float32)    # (10, 6, 3, 3)
    b2 = np.asarray(params["b2"], np.float32)    # (10,)
    l1w = np.asarray(params["l1w"], np.float32)  # (p0, 29)
    l1b = np.asarray(params["l1b"], np.float32)
    l2w = np.asarray(params["l2w"], np.float32)  # (p1, 30+p0)
    l2b = np.asarray(params["l2b"], np.float32)
    l3pw = np.asarray(params["l3pw"], np.float32)  # (out, p1)
    l3pb = np.asarray(params["l3pb"], np.float32)
    l3vw = np.asarray(params["l3vw"], np.float32)  # (1, p1)
    l3vb = np.asarray(params["l3vb"], np.float32)

    p0 = l1w.shape[0]
    p1 = l2w.shape[0]
    p0p = _round_up(p0, _LANE)
    p1p = _round_up(p1, _LANE)
    outp = _round_up(policy_out_dim + 1, _LANE)

    # merged input layout: lanes [0,29) = ob_other, lanes [29,99) = image (ci,y,x) flat
    IMG_OFF = 29

    # ---- conv1: (2,5,7) -> (6,5,7), k=3, pad=1 ; output in conv layout co*35+y*7+x ----
    Ci, Co, H, W = 2, 6, 5, 7
    N_H1 = _round_up(Co * H * W, _LANE)                    # 256
    M1p = np.zeros((_LANE, N_H1), np.float32)              # (128, 256)
    B1p = np.zeros((1, N_H1), np.float32)
    for co in range(Co):
        for y in range(H):
            for x in range(W):
                o = co * H * W + y * W + x
                B1p[0, o] = b1[co]
                for ci in range(Ci):
                    for dy in range(3):
                        for dx in range(3):
                            iy, ix = y + dy - 1, x + dx - 1
                            if 0 <= iy < H and 0 <= ix < W:
                                M1p[IMG_OFF + ci * H * W + iy * W + ix, o] += w1[co, ci, dy, dx]

    # ---- conv2: (6,4,6) -> (10,2,4), k=3, pad=0, with the pool1 compaction folded:
    #      input rows are indexed in the conv1-output (rolled-pool) layout ci*35+py*7+px ----
    C2o, H2, W2 = 10, 2, 4
    N_H2 = _round_up(C2o * H2 * W2, _LANE)                 # 128
    M2p = np.zeros((N_H1, N_H2), np.float32)               # (256, 128)
    B2p = np.zeros((1, N_H2), np.float32)
    for co in range(C2o):
        for y in range(H2):
            for x in range(W2):
                o = co * H2 * W2 + y * W2 + x
                B2p[0, o] = b2[co]
                for ci in range(Co):
                    for dy in range(3):
                        for dx in range(3):
                            M2p[ci * H * W + (y + dy) * W + (x + dx), o] += w2[co, ci, dy, dx]

    # ---- linear1: rows at lanes 0..28 of the merged input ----
    L1Wp = np.zeros((_LANE, p0p), np.float32); L1Wp[:29, :p0] = l1w.T
    L1Bp = np.zeros((1, p0p), np.float32);     L1Bp[0, :p0] = l1b

    # ---- linear2 (conv branch) with the pool2 compaction folded:
    #      torch's pool2.view(-1,30) index co*3+x maps to conv2-layout lane co*8+x ----
    L2WaP = np.zeros((N_H2, p1p), np.float32)              # (128, p1p)
    for co in range(C2o):
        for x in range(3):
            L2WaP[co * H2 * W2 + x, :p1] = l2w[:, co * 3 + x]
    # linear2 (branch_b part) and bias
    L2WbP = np.zeros((p0p, p1p), np.float32);  L2WbP[:p0, :p1] = l2w[:, 30:].T
    L2Bp = np.zeros((1, p1p), np.float32);     L2Bp[0, :p1] = l2b

    # ---- fused policy+value head: cols [0:out) = policy logits, col [out] = value ----
    HWp = np.zeros((p1p, outp), np.float32)
    HWp[:p1, :policy_out_dim] = l3pw.T
    HWp[:p1, policy_out_dim:policy_out_dim + 1] = l3vw.T
    HBp = np.zeros((1, outp), np.float32)
    HBp[0, :policy_out_dim] = l3pb
    HBp[0, policy_out_dim] = l3vb[0]

    weights = (M1p, B1p, M2p, B2p, L1Wp, L1Bp, L2WaP, L2WbP, L2Bp, HWp, HBp)
    return tuple(jnp.asarray(w) for w in weights)


# --------------------------------------------------------------------------
# Jitted forward
# --------------------------------------------------------------------------
@functools.partial(jax.jit, static_argnames=("policy_out_dim",))
def cnn_forward(ob, prepared, *, policy_out_dim):
    ob = jnp.asarray(ob, jnp.float32)
    B, F = ob.shape
    assert F == 99, "ob layout must be [29 other | 70 image] features"

    # adaptive batch tiling: >=4 tiles for mid/large batches (v7x TC sharding +
    # pipeline overlap), small padding; TB capped at 512 rows (f32) — tiny VMEM.
    tiles_target = 4 if B >= 64 else 1
    TB = min(512, _round_up(-(-B // tiles_target), 8))
    TB = max(TB, 8)
    B_pad = _round_up(B, TB)
    n_tiles = B_pad // TB

    # single merged lane-dense input: ob is already [other | image]; pad to 128 lanes
    x_p = jnp.pad(ob, ((0, B_pad - B), (0, _LANE - F)))

    weights = prepared
    outp = weights[9].shape[1]      # padded fused-head width (>=128)

    act_spec = lambda cols: pl.BlockSpec((TB, cols), lambda i: (i, 0))
    w_spec = lambda w: pl.BlockSpec(w.shape, lambda i: (0, 0))   # VMEM-resident

    # real cost after pool-matmul removal / input merge
    mm_ws = (weights[0], weights[2], weights[4], weights[6], weights[7], weights[9])
    flops_per_row = 2 * sum(int(w.shape[0] * w.shape[1]) for w in mm_ws)
    bytes_accessed = 4 * (int(B_pad) * (_LANE + int(outp))
                          + sum(int(np.prod(w.shape)) for w in weights))

    out = pl.pallas_call(
        cnn_forward_kernel,
        out_shape=jax.ShapeDtypeStruct((B_pad, outp), jnp.float32),
        grid=(n_tiles,),
        in_specs=[act_spec(_LANE)] + [w_spec(w) for w in weights],
        out_specs=act_spec(outp),
        compiler_params=pltpu.CompilerParams(
            dimension_semantics=("parallel",),
            vmem_limit_bytes=24 * 1024 * 1024),
        cost_estimate=pl.CostEstimate(flops=flops_per_row * int(B_pad),
                                      transcendentals=0,
                                      bytes_accessed=bytes_accessed),
    )(x_p, *weights)

    logits = out[:B, :policy_out_dim]
    value = out[:B, policy_out_dim:policy_out_dim + 1]
    # TODO(synk): torch.distributions.Categorical has no kernel equivalent;
    # the kernel returns the raw logits that parameterize it.
    return logits, value


# --------------------------------------------------------------------------
# Deterministic PyTorch-like parameter init (test fixture)
# --------------------------------------------------------------------------
def init_params(key, policy_size, policy_out_dim):
    def unif(k, shape, fan_in):
        bound = 1.0 / np.sqrt(fan_in)
        return jax.random.uniform(k, shape, jnp.float32, -bound, bound)

    ks = jax.random.split(key, 12)
    p0, p1 = policy_size
    return {
        "w1": unif(ks[0], (6, 2, 3, 3), 2 * 9),   "b1": unif(ks[1], (6,), 2 * 9),
        "w2": unif(ks[2], (10, 6, 3, 3), 6 * 9),  "b2": unif(ks[3], (10,), 6 * 9),
        "l1w": unif(ks[4], (p0, 29), 29),          "l1b": unif(ks[5], (p0,), 29),
        "l2w": unif(ks[6], (p1, 30 + p0), 30 + p0), "l2b": unif(ks[7], (p1,), 30 + p0),
        "l3pw": unif(ks[8], (policy_out_dim, p1), p1), "l3pb": unif(ks[9], (policy_out_dim,), p1),
        "l3vw": unif(ks[10], (1, p1), p1),         "l3vb": unif(ks[11], (1,), p1),
    }


# --------------------------------------------------------------------------
# Pure-JAX reference (lax.conv / reduce_window) for correctness cross-check
# --------------------------------------------------------------------------
def reference_forward(ob, params):
    B = ob.shape[0]
    data = ob[:, -70:].reshape(B, 2, 5, 7)
    other = ob[:, :-70].reshape(B, 29)

    def conv(x, w, b, pad):
        dn = lax.conv_dimension_numbers(x.shape, w.shape, ("NCHW", "OIHW", "NCHW"))
        y = lax.conv_general_dilated(x, w, (1, 1), [(pad, pad), (pad, pad)],
                                     dimension_numbers=dn)
        return y + b[None, :, None, None]

    def maxpool(x):
        return lax.reduce_window(x, -jnp.inf, lax.max, (1, 1, 2, 2), (1, 1, 1, 1), "VALID")

    x = maxpool(jnp.maximum(conv(data, params["w1"], params["b1"], 1), 0.0))
    x = maxpool(jnp.maximum(conv(x, params["w2"], params["b2"], 0), 0.0))
    x = x.reshape(B, 30)
    bb = jnp.maximum(other @ params["l1w"].T + params["l1b"], 0.0)
    feat = jnp.concatenate([x, bb], axis=1)
    h = jnp.maximum(feat @ params["l2w"].T + params["l2b"], 0.0)
    logits = h @ params["l3pw"].T + params["l3pb"]
    value = h @ params["l3vw"].T + params["l3vb"]
    return logits, value


if __name__ == "__main__":
    policy_size = (32, 32)
    policy_out_dim = 5
    ob_dim = 29 + 70  # 99

    key = jax.random.PRNGKey(0)
    k_ob, k_ob2, k_par = jax.random.split(key, 3)
    params = init_params(k_par, policy_size, policy_out_dim)

    # one-time parameter preparation (re-run only when params change)
    prepared = prepare_params(params, policy_out_dim)

    # small batch (single tile)
    ob = jax.random.normal(k_ob, (4, ob_dim), jnp.float32)
    logits, value = cnn_forward(ob, prepared, policy_out_dim=policy_out_dim)
    jax.block_until_ready((logits, value))
    ref_logits, ref_value = reference_forward(ob, params)
    np.testing.assert_allclose(np.asarray(logits), np.asarray(ref_logits), rtol=1e-3, atol=5e-3)
    np.testing.assert_allclose(np.asarray(value), np.asarray(ref_value), rtol=1e-3, atol=5e-3)

    # larger batch (multi-tile path with padding)
    ob2 = jax.random.normal(k_ob2, (300, ob_dim), jnp.float32)
    logits2, value2 = cnn_forward(ob2, prepared, policy_out_dim=policy_out_dim)
    jax.block_until_ready((logits2, value2))
    ref_logits2, ref_value2 = reference_forward(ob2, params)
    np.testing.assert_allclose(np.asarray(logits2), np.asarray(ref_logits2), rtol=1e-3, atol=5e-3)
    np.testing.assert_allclose(np.asarray(value2), np.asarray(ref_value2), rtol=1e-3, atol=5e-3)

    print("KERNEL_OK")
</pallas_src>

<mosaic_0001>
module attributes {stable_mosaic.version = 11 : i64} {
  func.func @cnn_forward_kernel(%arg0: i32, %arg1: memref<8x128xf32, #tpu.memory_space<vmem>>, %arg2: memref<128x256xf32, #tpu.memory_space<vmem>>, %arg3: memref<1x256xf32, #tpu.memory_space<vmem>>, %arg4: memref<256x128xf32, #tpu.memory_space<vmem>>, %arg5: memref<1x128xf32, #tpu.memory_space<vmem>>, %arg6: memref<128x128xf32, #tpu.memory_space<vmem>>, %arg7: memref<1x128xf32, #tpu.memory_space<vmem>>, %arg8: memref<128x128xf32, #tpu.memory_space<vmem>>, %arg9: memref<128x128xf32, #tpu.memory_space<vmem>>, %arg10: memref<1x128xf32, #tpu.memory_space<vmem>>, %arg11: memref<128x128xf32, #tpu.memory_space<vmem>>, %arg12: memref<1x128xf32, #tpu.memory_space<vmem>>, %arg13: memref<8x128xf32, #tpu.memory_space<vmem>>) attributes {dimension_semantics = [#tpu.dimension_semantics<parallel>], iteration_bounds = array<i64: 1>, scalar_prefetch = 0 : i64, scratch_operands = 0 : i64, tpu.core_type = #tpu.core_type<tc>, window_params = [{transform_indices = @transform_0, window_bounds = array<i64: 8, 128>}, {pipeline_mode = #tpu.pipeline_mode<synchronous>, transform_indices = @transform_1, window_bounds = array<i64: 128, 256>}, {pipeline_mode = #tpu.pipeline_mode<synchronous>, transform_indices = @transform_2, window_bounds = array<i64: 1, 256>}, {pipeline_mode = #tpu.pipeline_mode<synchronous>, transform_indices = @transform_3, window_bounds = array<i64: 256, 128>}, {pipeline_mode = #tpu.pipeline_mode<synchronous>, transform_indices = @transform_4, window_bounds = array<i64: 1, 128>}, {pipeline_mode = #tpu.pipeline_mode<synchronous>, transform_indices = @transform_5, window_bounds = array<i64: 128, 128>}, {pipeline_mode = #tpu.pipeline_mode<synchronous>, transform_indices = @transform_6, window_bounds = array<i64: 1, 128>}, {pipeline_mode = #tpu.pipeline_mode<synchronous>, transform_indices = @transform_7, window_bounds = array<i64: 128, 128>}, {pipeline_mode = #tpu.pipeline_mode<synchronous>, transform_indices = @transform_8, window_bounds = array<i64: 128, 128>}, {pipeline_mode = #tpu.pipeline_mode<synchronous>, transform_indices = @transform_9, window_bounds = array<i64: 1, 128>}, {pipeline_mode = #tpu.pipeline_mode<synchronous>, transform_indices = @transform_10, window_bounds = array<i64: 128, 128>}, {pipeline_mode = #tpu.pipeline_mode<synchronous>, transform_indices = @transform_11, window_bounds = array<i64: 1, 128>}, {transform_indices = @transform_12, window_bounds = array<i64: 8, 128>}]} {
    %c0 = arith.constant 0 : index
    %c0_0 = arith.constant 0 : index
    %0 = vector.load %arg1[%c0, %c0_0] : memref<8x128xf32, #tpu.memory_space<vmem>>, vector<8x128xf32>
    %c0_1 = arith.constant 0 : index
    %c0_2 = arith.constant 0 : index
    %1 = vector.load %arg2[%c0_1, %c0_2] : memref<128x256xf32, #tpu.memory_space<vmem>>, vector<128x256xf32>
    %cst = arith.constant dense<0.000000e+00> : vector<8x256xf32>
    %2 = tpu.matmul %0, %1, %cst {dimension_numbers = #tpu.dot_dimension_numbers<[1], [0], [0], [1], [0, 0, 1, 1], [], []>} : vector<8x128xf32>, vector<128x256xf32>, vector<8x256xf32> -> vector<8x256xf32>
    %c0_3 = arith.constant 0 : index
    %c0_4 = arith.constant 0 : index
    %3 = vector.load %arg3[%c0_3, %c0_4] : memref<1x256xf32, #tpu.memory_space<vmem>>, vector<1x256xf32>
    %4 = vector.broadcast %3 : vector<1x256xf32> to vector<8x256xf32>
    %5 = arith.addf %2, %4 : vector<8x256xf32>
    %cst_5 = arith.constant 0.000000e+00 : f32
    %6 = vector.broadcast %cst_5 : f32 to vector<8x256xf32>
    %7 = arith.maximumf %5, %6 : vector<8x256xf32>
    %c255_i32 = arith.constant 255 : i32
    %8 = tpu.dynamic_rotate %7 by %c255_i32 dim 1 : vector<8x256xf32>, i32 -> vector<8x256xf32>
    %c249_i32 = arith.constant 249 : i32
    %9 = tpu.dynamic_rotate %7 by %c249_i32 dim 1 : vector<8x256xf32>, i32 -> vector<8x256xf32>
    %c248_i32 = arith.constant 248 : i32
    %10 = tpu.dynamic_rotate %7 by %c248_i32 dim 1 : vector<8x256xf32>, i32 -> vector<8x256xf32>
    %11 = arith.maximumf %7, %8 : vector<8x256xf32>
    %12 = arith.maximumf %9, %10 : vector<8x256xf32>
    %13 = arith.maximumf %11, %12 : vector<8x256xf32>
    %c0_6 = arith.constant 0 : index
    %c0_7 = arith.constant 0 : index
    %14 = vector.load %arg4[%c0_6, %c0_7] : memref<256x128xf32, #tpu.memory_space<vmem>>, vector<256x128xf32>
    %cst_8 = arith.constant dense<0.000000e+00> : vector<8x128xf32>
    %15 = tpu.matmul %13, %14, %cst_8 {dimension_numbers = #tpu.dot_dimension_numbers<[1], [0], [0], [1], [0, 0, 1, 1], [], []>} : vector<8x256xf32>, vector<256x128xf32>, vector<8x128xf32> -> vector<8x128xf32>
    %c0_9 = arith.constant 0 : index
    %c0_10 = arith.constant 0 : index
    %16 = vector.load %arg5[%c0_9, %c0_10] : memref<1x128xf32, #tpu.memory_space<vmem>>, vector<1x128xf32>
    %17 = vector.broadcast %16 : vector<1x128xf32> to vector<8x128xf32>
    %18 = arith.addf %15, %17 : vector<8x128xf32>
    %cst_11 = arith.constant 0.000000e+00 : f32
    %19 = vector.broadcast %cst_11 : f32 to vector<8x128xf32>
    %20 = arith.maximumf %18, %19 : vector<8x128xf32>
    %c127_i32 = arith.constant 127 : i32
    %21 = tpu.dynamic_rotate %20 by %c127_i32 dim 1 : vector<8x128xf32>, i32 -> vector<8x128xf32>
    %c124_i32 = arith.constant 124 : i32
    %22 = tpu.dynamic_rotate %20 by %c124_i32 dim 1 : vector<8x128xf32>, i32 -> vector<8x128xf32>
    %c123_i32 = arith.constant 123 : i32
    %23 = tpu.dynamic_rotate %20 by %c123_i32 dim 1 : vector<8x128xf32>, i32 -> vector<8x128xf32>
    %24 = arith.maximumf %20, %21 : vector<8x128xf32>
    %25 = arith.maximumf %22, %23 : vector<8x128xf32>
    %26 = arith.maximumf %24, %25 : vector<8x128xf32>
    %c0_12 = arith.constant 0 : index
    %c0_13 = arith.constant 0 : index
    %27 = vector.load %arg6[%c0_12, %c0_13] : memref<128x128xf32, #tpu.memory_space<vmem>>, vector<128x128xf32>
    %cst_14 = arith.constant dense<0.000000e+00> : vector<8x128xf32>
    %28 = tpu.matmul %0, %27, %cst_14 {dimension_numbers = #tpu.dot_dimension_numbers<[1], [0], [0], [1], [0, 0, 1, 1], [], []>} : vector<8x128xf32>, vector<128x128xf32>, vector<8x128xf32> -> vector<8x128xf32>
    %c0_15 = arith.constant 0 : index
    %c0_16 = arith.constant 0 : index
    %29 = vector.load %arg7[%c0_15, %c0_16] : memref<1x128xf32, #tpu.memory_space<vmem>>, vector<1x128xf32>
    %30 = vector.broadcast %29 : vector<1x128xf32> to vector<8x128xf32>
    %31 = arith.addf %28, %30 : vector<8x128xf32>
    %cst_17 = arith.constant 0.000000e+00 : f32
    %32 = vector.broadcast %cst_17 : f32 to vector<8x128xf32>
    %33 = arith.maximumf %31, %32 : vector<8x128xf32>
    %c0_18 = arith.constant 0 : index
    %c0_19 = arith.constant 0 : index
    %34 = vector.load %arg8[%c0_18, %c0_19] : memref<128x128xf32, #tpu.memory_space<vmem>>, vector<128x128xf32>
    %cst_20 = arith.constant dense<0.000000e+00> : vector<8x128xf32>
    %35 = tpu.matmul %26, %34, %cst_20 {dimension_numbers = #tpu.dot_dimension_numbers<[1], [0], [0], [1], [0, 0, 1, 1], [], []>} : vector<8x128xf32>, vector<128x128xf32>, vector<8x128xf32> -> vector<8x128xf32>
    %c0_21 = arith.constant 0 : index
    %c0_22 = arith.constant 0 : index
    %36 = vector.load %arg9[%c0_21, %c0_22] : memref<128x128xf32, #tpu.memory_space<vmem>>, vector<128x128xf32>
    %cst_23 = arith.constant dense<0.000000e+00> : vector<8x128xf32>
    %37 = tpu.matmul %33, %36, %cst_23 {dimension_numbers = #tpu.dot_dimension_numbers<[1], [0], [0], [1], [0, 0, 1, 1], [], []>} : vector<8x128xf32>, vector<128x128xf32>, vector<8x128xf32> -> vector<8x128xf32>
    %38 = arith.addf %35, %37 : vector<8x128xf32>
    %c0_24 = arith.constant 0 : index
    %c0_25 = arith.constant 0 : index
    %39 = vector.load %arg10[%c0_24, %c0_25] : memref<1x128xf32, #tpu.memory_space<vmem>>, vector<1x128xf32>
    %40 = vector.broadcast %39 : vector<1x128xf32> to vector<8x128xf32>
    %41 = arith.addf %38, %40 : vector<8x128xf32>
    %cst_26 = arith.constant 0.000000e+00 : f32
    %42 = vector.broadcast %cst_26 : f32 to vector<8x128xf32>
    %43 = arith.maximumf %41, %42 : vector<8x128xf32>
    %c0_27 = arith.constant 0 : index
    %c0_28 = arith.constant 0 : index
    %44 = vector.load %arg11[%c0_27, %c0_28] : memref<128x128xf32, #tpu.memory_space<vmem>>, vector<128x128xf32>
    %cst_29 = arith.constant dense<0.000000e+00> : vector<8x128xf32>
    %45 = tpu.matmul %43, %44, %cst_29 {dimension_numbers = #tpu.dot_dimension_numbers<[1], [0], [0], [1], [0, 0, 1, 1], [], []>} : vector<8x128xf32>, vector<128x128xf32>, vector<8x128xf32> -> vector<8x128xf32>
    %c0_30 = arith.constant 0 : index
    %c0_31 = arith.constant 0 : index
    %46 = vector.load %arg12[%c0_30, %c0_31] : memref<1x128xf32, #tpu.memory_space<vmem>>, vector<1x128xf32>
    %47 = vector.broadcast %46 : vector<1x128xf32> to vector<8x128xf32>
    %48 = arith.addf %45, %47 : vector<8x128xf32>
    %c0_32 = arith.constant 0 : index
    %c0_33 = arith.constant 0 : index
    %49 = vector.load %arg13[%c0_32, %c0_33] : memref<8x128xf32, #tpu.memory_space<vmem>>, vector<8x128xf32>
    tpu.vector_store %arg13[%c0_32, %c0_33], %48 {strides = array<i32>} : memref<8x128xf32, #tpu.memory_space<vmem>>, vector<8x128xf32>,
    return
  }
  func.func @transform_0(%arg0: i32) -> (i32, i32) {
    %c0_i32 = arith.constant 0 : i32
    %c0_i32_0 = arith.constant 0 : i32
    return %arg0, %c0_i32 : i32, i32
  }
  func.func @transform_1(%arg0: i32) -> (i32, i32) {
    %c0_i32 = arith.constant 0 : i32
    %c0_i32_0 = arith.constant 0 : i32
    %c0_i32_1 = arith.constant 0 : i32
    return %c0_i32, %c0_i32_0 : i32, i32
  }
  func.func @transform_2(%arg0: i32) -> (i32, i32) {
    %c0_i32 = arith.constant 0 : i32
    %c0_i32_0 = arith.constant 0 : i32
    %c0_i32_1 = arith.constant 0 : i32
    return %c0_i32, %c0_i32_0 : i32, i32
  }
  func.func @transform_3(%arg0: i32) -> (i32, i32) {
    %c0_i32 = arith.constant 0 : i32
    %c0_i32_0 = arith.constant 0 : i32
    %c0_i32_1 = arith.constant 0 : i32
    return %c0_i32, %c0_i32_0 : i32, i32
  }
  func.func @transform_4(%arg0: i32) -> (i32, i32) {
    %c0_i32 = arith.constant 0 : i32
    %c0_i32_0 = arith.constant 0 : i32
    %c0_i32_1 = arith.constant 0 : i32
    return %c0_i32, %c0_i32_0 : i32, i32
  }
  func.func @transform_5(%arg0: i32) -> (i32, i32) {
    %c0_i32 = arith.constant 0 : i32
    %c0_i32_0 = arith.constant 0 : i32
    %c0_i32_1 = arith.constant 0 : i32
    return %c0_i32, %c0_i32_0 : i32, i32
  }
  func.func @transform_6(%arg0: i32) -> (i32, i32) {
    %c0_i32 = arith.constant 0 : i32
    %c0_i32_0 = arith.constant 0 : i32
    %c0_i32_1 = arith.constant 0 : i32
    return %c0_i32, %c0_i32_0 : i32, i32
  }
  func.func @transform_7(%arg0: i32) -> (i32, i32) {
    %c0_i32 = arith.constant 0 : i32
    %c0_i32_0 = arith.constant 0 : i32
    %c0_i32_1 = arith.constant 0 : i32
    return %c0_i32, %c0_i32_0 : i32, i32
  }
  func.func @transform_8(%arg0: i32) -> (i32, i32) {
    %c0_i32 = arith.constant 0 : i32
    %c0_i32_0 = arith.constant 0 : i32
    %c0_i32_1 = arith.constant 0 : i32
    return %c0_i32, %c0_i32_0 : i32, i32
  }
  func.func @transform_9(%arg0: i32) -> (i32, i32) {
    %c0_i32 = arith.constant 0 : i32
    %c0_i32_0 = arith.constant 0 : i32
    %c0_i32_1 = arith.constant 0 : i32
    return %c0_i32, %c0_i32_0 : i32, i32
  }
  func.func @transform_10(%arg0: i32) -> (i32, i32) {
    %c0_i32 = arith.constant 0 : i32
    %c0_i32_0 = arith.constant 0 : i32
    %c0_i32_1 = arith.constant 0 : i32
    return %c0_i32, %c0_i32_0 : i32, i32
  }
  func.func @transform_11(%arg0: i32) -> (i32, i32) {
    %c0_i32 = arith.constant 0 : i32
    %c0_i32_0 = arith.constant 0 : i32
    %c0_i32_1 = arith.constant 0 : i32
    return %c0_i32, %c0_i32_0 : i32, i32
  }
  func.func @transform_12(%arg0: i32) -> (i32, i32) {
    %c0_i32 = arith.constant 0 : i32
    %c0_i32_0 = arith.constant 0 : i32
    return %arg0, %c0_i32 : i32, i32
  }
}

</mosaic_0001>

<llo_original>
// kernel: cnn_forward.1
$region0: #{cnn_forward.1}
  #allocation0 [shape = 'u32[]', space=smem, size = 0x4, offset = 0x4, fixed_abs, tag = 'smem constant byte address 0x4 - core index']
  #allocation1 [shape = 'u32[144,128]{1,0:T(1,128)}', space=vmem, size = 0x12000, scoped, tag = 'internal scratch']
  %s0 = inlined_call_operand.vmem [shape: f32[8,128], index: 0, kind: input, shape index: {}]
  %s1 = inlined_call_operand.hbm [shape: f32[128,256], index: 1, kind: input, shape index: {}]
  %s2 = inlined_call_operand.vmem [shape: f32[1,256], index: 2, kind: input, shape index: {}]
  %s3 = inlined_call_operand.hbm [shape: f32[256,128], index: 3, kind: input, shape index: {}]
  %s4 = inlined_call_operand.vmem [shape: f32[1,128], index: 4, kind: input, shape index: {}]
  %s5 = inlined_call_operand.hbm [shape: f32[128,128], index: 5, kind: input, shape index: {}]
  %s6 = inlined_call_operand.vmem [shape: f32[1,128], index: 6, kind: input, shape index: {}]
  %s7 = inlined_call_operand.hbm [shape: f32[128,128], index: 7, kind: input, shape index: {}]
  %s8 = inlined_call_operand.hbm [shape: f32[128,128], index: 8, kind: input, shape index: {}]
  %s9 = inlined_call_operand.vmem [shape: f32[1,128], index: 9, kind: input, shape index: {}]
  %s10 = inlined_call_operand.hbm [shape: f32[128,128], index: 10, kind: input, shape index: {}]
  %s11 = inlined_call_operand.vmem [shape: f32[1,128], index: 11, kind: input, shape index: {}]
  %s12 = inlined_call_operand.vmem [shape: f32[8,128], index: 12, kind: output, shape index: {}]
  %s13 = sld [smem:[#allocation0]]
  $region82: #{cnn_forward.1} parent=0
    _
  %s15 = ssub.s32 1, %s13
  %s16 = scalar_select 0, %s15, %s13
  $region1: #{cnn_forward.1} parent=0
    #allocation2 [shape = 'u8[131072]{0}', space=vmem, size = 0x20000, scoped, tag = 'input window, operand 1, single buffered']
    #allocation3 [shape = 's32[1]{0}', space=sflag, size = 0x4, scoped, tag = 'scoped memory for cnn_forward.1']
    #allocation4 [shape = 'u8[131072]{0}', space=vmem, size = 0x20000, scoped, tag = 'input window, operand 3, single buffered']
    #allocation5 [shape = 's32[1]{0}', space=sflag, size = 0x4, scoped, tag = 'scoped memory for cnn_forward.1']
    #allocation6 [shape = 'u8[65536]{0}', space=vmem, size = 0x10000, scoped, tag = 'input window, operand 5, single buffered']
    #allocation7 [shape = 'u8[65536]{0}', space=vmem, size = 0x10000, scoped, tag = 'input window, operand 7, single buffered']
    #allocation8 [shape = 's32[1]{0}', space=sflag, size = 0x4, scoped, tag = 'scoped memory for cnn_forward.1']
    #allocation9 [shape = 'u8[65536]{0}', space=vmem, size = 0x10000, scoped, tag = 'input window, operand 8, single buffered']
    #allocation10 [shape = 'u8[65536]{0}', space=vmem, size = 0x10000, scoped, tag = 'input window, operand 10, single buffered']
    #allocation11 [shape = 's32[1]{0}', space=sflag, size = 0x4, scoped, tag = 'scoped memory for cnn_forward.1']
    %17 = vsyncpa [#allocation3], 0
    %18 = vsyncpa [#allocation5], 0
    %19 = vsyncpa [#allocation8], 0
    %20 = vsyncpa [#allocation11], 0
    // Predicated region
    $region2: #{cnn_forward.1} parent=1 // pred_check
      _
    $region3: #{cnn_forward.1} parent=1 // pred_check_branch
      %22 = sbr.rel (0) target = $region5
    $region4: #{cnn_forward.1} parent=1 // pred_region
      _
    $region5: #{cnn_forward.1} parent=1 // pred_fallthru
      _
    // Predicated region
    $region6: #{cnn_forward.1} parent=1 // pred_check
      _
    $region7: #{cnn_forward.1} parent=1 // pred_check_branch
      %24 = sbr.rel (0) target = $region9
    $region8: #{cnn_forward.1} parent=1 // pred_region
      %s26 = ssub.s32 4096, 4096
      %27 = vsyncadd [#allocation3], %s26
      %s28 = sshll.u32 [#allocation2], 4
      %s29 = int_to_ptr.vmem [resolvable:$true] %s28
      %34 = dma.hbm_to_vmem [thread:$0]  %s1, 4096, %s29, [#allocation3], 256, 256, 16
    $region9: #{cnn_forward.1} parent=1 // pred_fallthru
      _
    // Predicated region
    $region10: #{cnn_forward.1} parent=1 // pred_check
      _
    $region11: #{cnn_forward.1} parent=1 // pred_check_branch
      %36 = sbr.rel (0) target = $region13
    $region12: #{cnn_forward.1} parent=1 // pred_region
      _
    $region13: #{cnn_forward.1} parent=1 // pred_fallthru
      _
    // Predicated region
    $region14: #{cnn_forward.1} parent=1 // pred_check
      _
    $region15: #{cnn_forward.1} parent=1 // pred_check_branch
      %38 = sbr.rel (0) target = $region17
    $region16: #{cnn_forward.1} parent=1 // pred_region
      %s40 = ssub.s32 4096, 4096
      %41 = vsyncadd [#allocation5], %s40
      %s42 = sshll.u32 [#allocation4], 4
      %s43 = int_to_ptr.vmem [resolvable:$true] %s42
      %48 = dma.hbm_to_vmem [thread:$0]  %s3, 4096, %s43, [#allocation5], 128, 128, 8
    $region17: #{cnn_forward.1} parent=1 // pred_fallthru
      _
    // Predicated region
    $region18: #{cnn_forward.1} parent=1 // pred_check
      _
    $region19: #{cnn_forward.1} parent=1 // pred_check_branch
      %50 = sbr.rel (0) target = $region21
    $region20: #{cnn_forward.1} parent=1 // pred_region
      _
    $region21: #{cnn_forward.1} parent=1 // pred_fallthru
      _
    // Predicated region
    $region22: #{cnn_forward.1} parent=1 // pred_check
      _
    $region23: #{cnn_forward.1} parent=1 // pred_check_branch
      %52 = sbr.rel (0) target = $region25
    $region24: #{cnn_forward.1} parent=1 // pred_region
      %s54 = ssub.s32 2048, 2048
      %55 = vsyncadd [#allocation5], %s54
      %s56 = sshll.u32 [#allocation6], 4
      %s57 = int_to_ptr.vmem [resolvable:$true] %s56
      %62 = dma.hbm_to_vmem [thread:$0]  %s5, 2048, %s57, [#allocation5], 128, 128, 8
    $region25: #{cnn_forward.1} parent=1 // pred_fallthru
      _
    // Predicated region
    $region26: #{cnn_forward.1} parent=1 // pred_check
      _
    $region27: #{cnn_forward.1} parent=1 // pred_check_branch
      %64 = sbr.rel (0) target = $region29
    $region28: #{cnn_forward.1} parent=1 // pred_region
      _
    $region29: #{cnn_forward.1} parent=1 // pred_fallthru
      _
    // Predicated region
    $region30: #{cnn_forward.1} parent=1 // pred_check
      _
    $region31: #{cnn_forward.1} parent=1 // pred_check_branch
      %66 = sbr.rel (0) target = $region33
    $region32: #{cnn_forward.1} parent=1 // pred_region
      %s68 = ssub.s32 2048, 2048
      %69 = vsyncadd [#allocation8], %s68
      %s70 = sshll.u32 [#allocation7], 4
      %s71 = int_to_ptr.vmem [resolvable:$true] %s70
      %76 = dma.hbm_to_vmem [thread:$0]  %s7, 2048, %s71, [#allocation8], 128, 128, 8
    $region33: #{cnn_forward.1} parent=1 // pred_fallthru
      _
    // Predicated region
    $region34: #{cnn_forward.1} parent=1 // pred_check
      _
    $region35: #{cnn_forward.1} parent=1 // pred_check_branch
      %78 = sbr.rel (0) target = $region37
    $region36: #{cnn_forward.1} parent=1 // pred_region
      %s80 = ssub.s32 2048, 2048
      %81 = vsyncadd [#allocation8], %s80
      %s82 = sshll.u32 [#allocation9], 4
      %s83 = int_to_ptr.vmem [resolvable:$true] %s82
      %88 = dma.hbm_to_vmem [thread:$0]  %s8, 2048, %s83, [#allocation8], 128, 128, 8
    $region37: #{cnn_forward.1} parent=1 // pred_fallthru
      _
    // Predicated region
    $region38: #{cnn_forward.1} parent=1 // pred_check
      _
    $region39: #{cnn_forward.1} parent=1 // pred_check_branch
      %90 = sbr.rel (0) target = $region41
    $region40: #{cnn_forward.1} parent=1 // pred_region
      _
    $region41: #{cnn_forward.1} parent=1 // pred_fallthru
      _
    // Predicated region
    $region42: #{cnn_forward.1} parent=1 // pred_check
      _
    $region43: #{cnn_forward.1} parent=1 // pred_check_branch
      %92 = sbr.rel (0) target = $region45
    $region44: #{cnn_forward.1} parent=1 // pred_region
      %s94 = ssub.s32 2048, 2048
      %95 = vsyncadd [#allocation11], %s94
      %s96 = sshll.u32 [#allocation10], 4
      %s97 = int_to_ptr.vmem [resolvable:$true] %s96
      %102 = dma.hbm_to_vmem [thread:$0]  %s10, 2048, %s97, [#allocation11], 128, 128, 8
    $region45: #{cnn_forward.1} parent=1 // pred_fallthru
      _
    // Predicated region
    $region46: #{cnn_forward.1} parent=1 // pred_check
      _
    $region47: #{cnn_forward.1} parent=1 // pred_check_branch
      %104 = sbr.rel (0) target = $region49
    $region48: #{cnn_forward.1} parent=1 // pred_region
      _
    $region49: #{cnn_forward.1} parent=1 // pred_fallthru
      _
    // Predicated region
    $region50: #{cnn_forward.1} parent=1 // pred_check
      _
    $region51: #{cnn_forward.1} parent=1 // pred_check_branch
      %106 = sbr.rel (0) target = $region53
    $region52: #{cnn_forward.1} parent=1 // pred_region
      %107 = dma.done [#allocation3], 4096
    $region53: #{cnn_forward.1} parent=1 // pred_fallthru
      _
    // Predicated region
    $region54: #{cnn_forward.1} parent=1 // pred_check
      _
    $region55: #{cnn_forward.1} parent=1 // pred_check_branch
      %109 = sbr.rel (0) target = $region57
    $region56: #{cnn_forward.1} parent=1 // pred_region
      %110 = dma.done [#allocation5], 4096
    $region57: #{cnn_forward.1} parent=1 // pred_fallthru
      _
    // Predicated region
    $region58: #{cnn_forward.1} parent=1 // pred_check
      _
    $region59: #{cnn_forward.1} parent=1 // pred_check_branch
      %112 = sbr.rel (0) target = $region61
    $region60: #{cnn_forward.1} parent=1 // pred_region
      %113 = dma.done [#allocation5], 2048
    $region61: #{cnn_forward.1} parent=1 // pred_fallthru
      _
    // Predicated region
    $region62: #{cnn_forward.1} parent=1 // pred_check
      _
    $region63: #{cnn_forward.1} parent=1 // pred_check_branch
      %115 = sbr.rel (0) target = $region65
    $region64: #{cnn_forward.1} parent=1 // pred_region
      %116 = dma.done [#allocation8], 2048
    $region65: #{cnn_forward.1} parent=1 // pred_fallthru
      _
    // Predicated region
    $region66: #{cnn_forward.1} parent=1 // pred_check
      _
    $region67: #{cnn_forward.1} parent=1 // pred_check_branch
      %118 = sbr.rel (0) target = $region69
    $region68: #{cnn_forward.1} parent=1 // pred_region
      %119 = dma.done [#allocation8], 2048
    $region69: #{cnn_forward.1} parent=1 // pred_fallthru
      _
    // Predicated region
    $region70: #{cnn_forward.1} parent=1 // pred_check
      _
    $region71: #{cnn_forward.1} parent=1 // pred_check_branch
      %121 = sbr.rel (0) target = $region73
    $region72: #{cnn_forward.1} parent=1 // pred_region
      %122 = dma.done [#allocation11], 2048
    $region73: #{cnn_forward.1} parent=1 // pred_fallthru
      _
    %v123 = vld [vmem:[%s0] sm:$0xff]
    %v124 = vld [vmem:[#allocation2] sm:$0xff]
    %v125 = vld [vmem:[#allocation2 + $0x8] sm:$0xff]
    %v126 = vld [vmem:[#allocation2 + $0x10] sm:$0xff]
    %v127 = vld [vmem:[#allocation2 + $0x18] sm:$0xff]
    %v128 = vld [vmem:[#allocation2 + $0x20] sm:$0xff]
    %v129 = vld [vmem:[#allocation2 + $0x28] sm:$0xff]
    %v130 = vld [vmem:[#allocation2 + $0x30] sm:$0xff]
    %v131 = vld [vmem:[#allocation2 + $0x38] sm:$0xff]
    %v132 = vld [vmem:[#allocation2 + $0x40] sm:$0xff]
    %v133 = vld [vmem:[#allocation2 + $0x48] sm:$0xff]
    %v134 = vld [vmem:[#allocation2 + $0x50] sm:$0xff]
    %v135 = vld [vmem:[#allocation2 + $0x58] sm:$0xff]
    %v136 = vld [vmem:[#allocation2 + $0x60] sm:$0xff]
    %v137 = vld [vmem:[#allocation2 + $0x68] sm:$0xff]
    %v138 = vld [vmem:[#allocation2 + $0x70] sm:$0xff]
    %v139 = vld [vmem:[#allocation2 + $0x78] sm:$0xff]
    %v140 = vld [vmem:[#allocation2 + $0x80] sm:$0xff]
    %v141 = vld [vmem:[#allocation2 + $0x88] sm:$0xff]
    %v142 = vld [vmem:[#allocation2 + $0x90] sm:$0xff]
    %v143 = vld [vmem:[#allocation2 + $0x98] sm:$0xff]
    %v144 = vld [vmem:[#allocation2 + $0xa0] sm:$0xff]
    %v145 = vld [vmem:[#allocation2 + $0xa8] sm:$0xff]
    %v146 = vld [vmem:[#allocation2 + $0xb0] sm:$0xff]
    %v147 = vld [vmem:[#allocation2 + $0xb8] sm:$0xff]
    %v148 = vld [vmem:[#allocation2 + $0xc0] sm:$0xff]
    %v149 = vld [vmem:[#allocation2 + $0xc8] sm:$0xff]
    %v150 = vld [vmem:[#allocation2 + $0xd0] sm:$0xff]
    %v151 = vld [vmem:[#allocation2 + $0xd8] sm:$0xff]
    %v152 = vld [vmem:[#allocation2 + $0xe0] sm:$0xff]
    %v153 = vld [vmem:[#allocation2 + $0xe8] sm:$0xff]
    %v154 = vld [vmem:[#allocation2 + $0xf0] sm:$0xff]
    %v155 = vld [vmem:[#allocation2 + $0xf8] sm:$0xff]
    %v156 = vld [vmem:[%s2] sm:$0x3]
    %v158 = vlaneseq
    %v159 = vshrl.u32 %v158, 7
    %v160 = vsub.s32 0, %v159
    %v161 = vrot.slane %v156, %v160
    %v162 = vlaneseq
    %v163 = vshrl.u32 %v162, 7
    %v164 = vsub.s32 1, %v163
    %v165 = vrot.slane %v156, %v164
    %168 = vmatprep.subr.mxu0 %v155
    %169 = vmatpush1.msra.mxu0 %v154
    %170 = vmatprep.subr.mxu0 %v153
    %171 = vmatpush1.msra.mxu0 %v152
    %172 = vmatprep.subr.mxu0 %v151
    %173 = vmatpush1.msra.mxu0 %v150
    %174 = vmatprep.subr.mxu0 %v149
    %175 = vmatpush1.msra.mxu0 %v148
    %176 = vmatprep.subr.mxu0 %v147
    %177 = vmatpush1.msra.mxu0 %v146
    %178 = vmatprep.subr.mxu0 %v145
    %179 = vmatpush1.msra.mxu0 %v144
    %180 = vmatprep.subr.mxu0 %v143
    %181 = vmatpush1.msra.mxu0 %v142
    %182 = vmatprep.subr.mxu0 %v141
    %183 = vmatpush1.msra.mxu0 %v140
    %184 = vmatprep.subr.mxu0 %v139
    %185 = vmatpush1.msra.mxu0 %v138
    %186 = vmatprep.subr.mxu0 %v137
    %187 = vmatpush1.msra.mxu0 %v136
    %188 = vmatprep.subr.mxu0 %v135
    %189 = vmatpush1.msra.mxu0 %v134
    %190 = vmatprep.subr.mxu0 %v133
    %191 = vmatpush1.msra.mxu0 %v132
    %192 = vmatprep.subr.mxu0 %v131
    %193 = vmatpush1.msra.mxu0 %v130
    %194 = vmatprep.subr.mxu0 %v129
    %195 = vmatpush1.msra.mxu0 %v128
    %196 = vmatprep.subr.mxu0 %v127
    %197 = vmatpush1.msra.mxu0 %v126
    %198 = vmatprep.subr.mxu0 %v125
    %199 = vmatpush1.msra.mxu0 %v124
    %200 = vmatprep.subr.mxu0 0.0
    %201 = vmatpush2.msra.mxu0 0.0
    %202 = vmatprep.subr.mxu0 0.0
    %203 = vmatpush2.msra.mxu0 0.0
    %204 = vmatprep.subr.mxu0 0.0
    %205 = vmatpush2.msra.mxu0 0.0
    %206 = vmatprep.subr.mxu0 0.0
    %207 = vmatpush2.msra.mxu0 0.0
    %208 = vmatprep.subr.mxu0 0.0
    %209 = vmatpush2.msra.mxu0 0.0
    %210 = vmatprep.subr.mxu0 0.0
    %211 = vmatpush2.msra.mxu0 0.0
    %212 = vmatprep.subr.mxu0 0.0
    %213 = vmatpush2.msra.mxu0 0.0
    %214 = vmatprep.subr.mxu0 0.0
    %215 = vmatpush2.msra.mxu0 0.0
    %216 = vmatprep.subr.mxu0 0.0
    %217 = vmatpush2.msra.mxu0 0.0
    %218 = vmatprep.subr.mxu0 0.0
    %219 = vmatpush2.msra.mxu0 0.0
    %220 = vmatprep.subr.mxu0 0.0
    %221 = vmatpush2.msra.mxu0 0.0
    %222 = vmatprep.subr.mxu0 0.0
    %223 = vmatpush2.msra.mxu0 0.0
    %224 = vmatprep.subr.mxu0 0.0
    %225 = vmatpush2.msra.mxu0 0.0
    %226 = vmatprep.subr.mxu0 0.0
    %227 = vmatpush2.msra.mxu0 0.0
    %228 = vmatprep.subr.mxu0 0.0
    %229 = vmatpush2.msra.mxu0 0.0
    %230 = vmatprep.subr.mxu0 0.0
    %231 = vmatpush2.msra.mxu0 0.0
    %232 = vmatprep.mubr.f32.mxu0 0.0
    %233 = vmatmul.mubr.f32.gmra.mxu0 %v123
    %v234 = vpop.f32.mrf.mxu0
    %v235 = vadd.f32 %v161, %v234
    %v236 = vpop.f32.mrf.mxu0
    %v237 = vadd.f32 %v165, %v236
    %238 = vdwg.mxu0
    %v239 = vmax.f32 %v235, 0.0
    %v240 = vmax.f32 %v237, 0.0
    %241 = vrot.lane.b32.xlu0 %v239, 127
    %v242 = vpop.permute.xlu0 %241
    %243 = vrot.lane.b32.xlu0 %v240, 127
    %v244 = vpop.permute.xlu0 %243
    %v245 = vlaneseq
    %v246 = vand.u32 %v245, 127
    %vm247 = vcmp.lt.s32.totalorder %v246, 127
    %v248 = vsel %vm247, %v242, %v244
    %v249 = vsel %vm247, %v244, %v242
    %250 = vrot.lane.b32.xlu0 %v239, 121
    %v251 = vpop.permute.xlu0 %250
    %252 = vrot.lane.b32.xlu0 %v240, 121
    %v253 = vpop.permute.xlu0 %252
    %vm254 = vcmp.lt.s32.totalorder %v246, 121
    %v255 = vsel %vm254, %v251, %v253
    %v256 = vsel %vm254, %v253, %v251
    %257 = vrot.lane.b32.xlu0 %v239, 120
    %v258 = vpop.permute.xlu0 %257
    %259 = vrot.lane.b32.xlu0 %v240, 120
    %v260 = vpop.permute.xlu0 %259
    %vm261 = vcmp.lt.s32.totalorder %v246, 120
    %v262 = vsel %vm261, %v258, %v260
    %v263 = vsel %vm261, %v260, %v258
    %v264 = vmax.f32 %v239, %v248
    %v265 = vmax.f32 %v240, %v249
    %v266 = vmax.f32 %v255, %v262
    %v267 = vmax.f32 %v256, %v263
    %v268 = vmax.f32 %v264, %v266
    %v269 = vmax.f32 %v265, %v267
    %v270 = vld [vmem:[#allocation4] sm:$0xff]
    %v271 = vld [vmem:[#allocation4 + $0x8] sm:$0xff]
    %v272 = vld [vmem:[#allocation4 + $0x10] sm:$0xff]
    %v273 = vld [vmem:[#allocation4 + $0x18] sm:$0xff]
    %v274 = vld [vmem:[#allocation4 + $0x20] sm:$0xff]
    %v275 = vld [vmem:[#allocation4 + $0x28] sm:$0xff]
    %v276 = vld [vmem:[#allocation4 + $0x30] sm:$0xff]
    %v277 = vld [vmem:[#allocation4 + $0x38] sm:$0xff]
    %v278 = vld [vmem:[#allocation4 + $0x40] sm:$0xff]
    %v279 = vld [vmem:[#allocation4 + $0x48] sm:$0xff]
    %v280 = vld [vmem:[#allocation4 + $0x50] sm:$0xff]
    %v281 = vld [vmem:[#allocation4 + $0x58] sm:$0xff]
    %v282 = vld [vmem:[#allocation4 + $0x60] sm:$0xff]
    %v283 = vld [vmem:[#allocation4 + $0x68] sm:$0xff]
    %v284 = vld [vmem:[#allocation4 + $0x70] sm:$0xff]
    %v285 = vld [vmem:[#allocation4 + $0x78] sm:$0xff]
    %v286 = vld [vmem:[#allocation4 + $0x80] sm:$0xff]
    %v287 = vld [vmem:[#allocation4 + $0x88] sm:$0xff]
    %v288 = vld [vmem:[#allocation4 + $0x90] sm:$0xff]
    %v289 = vld [vmem:[#allocation4 + $0x98] sm:$0xff]
    %v290 = vld [vmem:[#allocation4 + $0xa0] sm:$0xff]
    %v291 = vld [vmem:[#allocation4 + $0xa8] sm:$0xff]
    %v292 = vld [vmem:[#allocation4 + $0xb0] sm:$0xff]
    %v293 = vld [vmem:[#allocation4 + $0xb8] sm:$0xff]
    %v294 = vld [vmem:[#allocation4 + $0xc0] sm:$0xff]
    %v295 = vld [vmem:[#allocation4 + $0xc8] sm:$0xff]
    %v296 = vld [vmem:[#allocation4 + $0xd0] sm:$0xff]
    %v297 = vld [vmem:[#allocation4 + $0xd8] sm:$0xff]
    %v298 = vld [vmem:[#allocation4 + $0xe0] sm:$0xff]
    %v299 = vld [vmem:[#allocation4 + $0xe8] sm:$0xff]
    %v300 = vld [vmem:[#allocation4 + $0xf0] sm:$0xff]
    %v301 = vld [vmem:[#allocation4 + $0xf8] sm:$0xff]
    %v302 = vld [vmem:[%s4] sm:$0x1]
    %v304 = vlaneseq
    %v305 = vshrl.u32 %v304, 7
    %v306 = vsub.s32 0, %v305
    %v307 = vrot.slane %v302, %v306
    %309 = vmatprep.subr.mxu0 0.0
    %310 = vmatpush1.msra.mxu0 %v285
    %311 = vmatprep.subr.mxu0 0.0
    %312 = vmatpush1.msra.mxu0 %v284
    %313 = vmatprep.subr.mxu0 0.0
    %314 = vmatpush1.msra.mxu0 %v283
    %315 = vmatprep.subr.mxu0 0.0
    %316 = vmatpush1.msra.mxu0 %v282
    %317 = vmatprep.subr.mxu0 0.0
    %318 = vmatpush1.msra.mxu0 %v281
    %319 = vmatprep.subr.mxu0 0.0
    %320 = vmatpush1.msra.mxu0 %v280
    %321 = vmatprep.subr.mxu0 0.0
    %322 = vmatpush1.msra.mxu0 %v279
    %323 = vmatprep.subr.mxu0 0.0
    %324 = vmatpush1.msra.mxu0 %v278
    %325 = vmatprep.subr.mxu0 0.0
    %326 = vmatpush1.msra.mxu0 %v277
    %327 = vmatprep.subr.mxu0 0.0
    %328 = vmatpush1.msra.mxu0 %v276
    %329 = vmatprep.subr.mxu0 0.0
    %330 = vmatpush1.msra.mxu0 %v275
    %331 = vmatprep.subr.mxu0 0.0
    %332 = vmatpush1.msra.mxu0 %v274
    %333 = vmatprep.subr.mxu0 0.0
    %334 = vmatpush1.msra.mxu0 %v273
    %335 = vmatprep.subr.mxu0 0.0
    %336 = vmatpush1.msra.mxu0 %v272
    %337 = vmatprep.subr.mxu0 0.0
    %338 = vmatpush1.msra.mxu0 %v271
    %339 = vmatprep.subr.mxu0 0.0
    %340 = vmatpush1.msra.mxu0 %v270
    %341 = vmatprep.subr.mxu0 0.0
    %342 = vmatpush2.msra.mxu0 %v301
    %343 = vmatprep.subr.mxu0 0.0
    %344 = vmatpush2.msra.mxu0 %v300
    %345 = vmatprep.subr.mxu0 0.0
    %346 = vmatpush2.msra.mxu0 %v299
    %347 = vmatprep.subr.mxu0 0.0
    %348 = vmatpush2.msra.mxu0 %v298
    %349 = vmatprep.subr.mxu0 0.0
    %350 = vmatpush2.msra.mxu0 %v297
    %351 = vmatprep.subr.mxu0 0.0
    %352 = vmatpush2.msra.mxu0 %v296
    %353 = vmatprep.subr.mxu0 0.0
    %354 = vmatpush2.msra.mxu0 %v295
    %355 = vmatprep.subr.mxu0 0.0
    %356 = vmatpush2.msra.mxu0 %v294
    %357 = vmatprep.subr.mxu0 0.0
    %358 = vmatpush2.msra.mxu0 %v293
    %359 = vmatprep.subr.mxu0 0.0
    %360 = vmatpush2.msra.mxu0 %v292
    %361 = vmatprep.subr.mxu0 0.0
    %362 = vmatpush2.msra.mxu0 %v291
    %363 = vmatprep.subr.mxu0 0.0
    %364 = vmatpush2.msra.mxu0 %v290
    %365 = vmatprep.subr.mxu0 0.0
    %366 = vmatpush2.msra.mxu0 %v289
    %367 = vmatprep.subr.mxu0 0.0
    %368 = vmatpush2.msra.mxu0 %v288
    %369 = vmatprep.subr.mxu0 0.0
    %370 = vmatpush2.msra.mxu0 %v287
    %371 = vmatprep.subr.mxu0 0.0
    %372 = vmatpush2.msra.mxu0 %v286
    %373 = vmatprep.mubr.f32.mxu0 %v269
    %374 = vmatmul.mubr.f32.gmra.mxu0 %v268
    %v375 = vpop.f32.mrf.mxu0
    %v376 = vadd.f32 %v307, %v375
    %v377 = vpop.f32.mrf.mxu0
    %378 = vdwg.mxu0
    %v379 = vmax.f32 %v376, 0.0
    %380 = vrot.lane.b32.xlu0 %v379, 127
    %v381 = vpop.permute.xlu0 %380
    %382 = vrot.lane.b32.xlu0 %v379, 124
    %v383 = vpop.permute.xlu0 %382
    %384 = vrot.lane.b32.xlu0 %v379, 123
    %v385 = vpop.permute.xlu0 %384
    %v386 = vmax.f32 %v379, %v381
    %v387 = vmax.f32 %v383, %v385
    %v388 = vmax.f32 %v386, %v387
    %v389 = vld [vmem:[#allocation6] sm:$0xff]
    %v390 = vld [vmem:[#allocation6 + $0x8] sm:$0xff]
    %v391 = vld [vmem:[#allocation6 + $0x10] sm:$0xff]
    %v392 = vld [vmem:[#allocation6 + $0x18] sm:$0xff]
    %v393 = vld [vmem:[#allocation6 + $0x20] sm:$0xff]
    %v394 = vld [vmem:[#allocation6 + $0x28] sm:$0xff]
    %v395 = vld [vmem:[#allocation6 + $0x30] sm:$0xff]
    %v396 = vld [vmem:[#allocation6 + $0x38] sm:$0xff]
    %v397 = vld [vmem:[#allocation6 + $0x40] sm:$0xff]
    %v398 = vld [vmem:[#allocation6 + $0x48] sm:$0xff]
    %v399 = vld [vmem:[#allocation6 + $0x50] sm:$0xff]
    %v400 = vld [vmem:[#allocation6 + $0x58] sm:$0xff]
    %v401 = vld [vmem:[#allocation6 + $0x60] sm:$0xff]
    %v402 = vld [vmem:[#allocation6 + $0x68] sm:$0xff]
    %v403 = vld [vmem:[#allocation6 + $0x70] sm:$0xff]
    %v404 = vld [vmem:[#allocation6 + $0x78] sm:$0xff]
    %v405 = vld [vmem:[%s6] sm:$0x1]
    %v407 = vlaneseq
    %v408 = vshrl.u32 %v407, 7
    %v409 = vsub.s32 0, %v408
    %v410 = vrot.slane %v405, %v409
    %412 = vmatprep.subr.mxu0 0.0
    %413 = vmatpush1.msra.mxu0 %v404
    %414 = vmatprep.subr.mxu0 0.0
    %415 = vmatpush1.msra.mxu0 %v403
    %416 = vmatprep.subr.mxu0 0.0
    %417 = vmatpush1.msra.mxu0 %v402
    %418 = vmatprep.subr.mxu0 0.0
    %419 = vmatpush1.msra.mxu0 %v401
    %420 = vmatprep.subr.mxu0 0.0
    %421 = vmatpush1.msra.mxu0 %v400
    %422 = vmatprep.subr.mxu0 0.0
    %423 = vmatpush1.msra.mxu0 %v399
    %424 = vmatprep.subr.mxu0 0.0
    %425 = vmatpush1.msra.mxu0 %v398
    %426 = vmatprep.subr.mxu0 0.0
    %427 = vmatpush1.msra.mxu0 %v397
    %428 = vmatprep.subr.mxu0 0.0
    %429 = vmatpush1.msra.mxu0 %v396
    %430 = vmatprep.subr.mxu0 0.0
    %431 = vmatpush1.msra.mxu0 %v395
    %432 = vmatprep.subr.mxu0 0.0
    %433 = vmatpush1.msra.mxu0 %v394
    %434 = vmatprep.subr.mxu0 0.0
    %435 = vmatpush1.msra.mxu0 %v393
    %436 = vmatprep.subr.mxu0 0.0
    %437 = vmatpush1.msra.mxu0 %v392
    %438 = vmatprep.subr.mxu0 0.0
    %439 = vmatpush1.msra.mxu0 %v391
    %440 = vmatprep.subr.mxu0 0.0
    %441 = vmatpush1.msra.mxu0 %v390
    %442 = vmatprep.subr.mxu0 0.0
    %443 = vmatpush1.msra.mxu0 %v389
    %444 = vmatprep.subr.mxu0 0.0
    %445 = vmatpush2.msra.mxu0 0.0
    %446 = vmatprep.subr.mxu0 0.0
    %447 = vmatpush2.msra.mxu0 0.0
    %448 = vmatprep.subr.mxu0 0.0
    %449 = vmatpush2.msra.mxu0 0.0
    %450 = vmatprep.subr.mxu0 0.0
    %451 = vmatpush2.msra.mxu0 0.0
    %452 = vmatprep.subr.mxu0 0.0
    %453 = vmatpush2.msra.mxu0 0.0
    %454 = vmatprep.subr.mxu0 0.0
    %455 = vmatpush2.msra.mxu0 0.0
    %456 = vmatprep.subr.mxu0 0.0
    %457 = vmatpush2.msra.mxu0 0.0
    %458 = vmatprep.subr.mxu0 0.0
    %459 = vmatpush2.msra.mxu0 0.0
    %460 = vmatprep.subr.mxu0 0.0
    %461 = vmatpush2.msra.mxu0 0.0
    %462 = vmatprep.subr.mxu0 0.0
    %463 = vmatpush2.msra.mxu0 0.0
    %464 = vmatprep.subr.mxu0 0.0
    %465 = vmatpush2.msra.mxu0 0.0
    %466 = vmatprep.subr.mxu0 0.0
    %467 = vmatpush2.msra.mxu0 0.0
    %468 = vmatprep.subr.mxu0 0.0
    %469 = vmatpush2.msra.mxu0 0.0
    %470 = vmatprep.subr.mxu0 0.0
    %471 = vmatpush2.msra.mxu0 0.0
    %472 = vmatprep.subr.mxu0 0.0
    %473 = vmatpush2.msra.mxu0 0.0
    %474 = vmatprep.subr.mxu0 0.0
    %475 = vmatpush2.msra.mxu0 0.0
    %476 = vmatprep.mubr.f32.mxu0 0.0
    %477 = vmatmul.mubr.f32.gmra.mxu0 %v123
    %v478 = vpop.f32.mrf.mxu0
    %v479 = vadd.f32 %v410, %v478
    %v480 = vpop.f32.mrf.mxu0
    %481 = vdwg.mxu0
    %v482 = vmax.f32 %v479, 0.0
    %v483 = vld [vmem:[#allocation7] sm:$0xff]
    %v484 = vld [vmem:[#allocation7 + $0x8] sm:$0xff]
    %v485 = vld [vmem:[#allocation7 + $0x10] sm:$0xff]
    %v486 = vld [vmem:[#allocation7 + $0x18] sm:$0xff]
    %v487 = vld [vmem:[#allocation7 + $0x20] sm:$0xff]
    %v488 = vld [vmem:[#allocation7 + $0x28] sm:$0xff]
    %v489 = vld [vmem:[#allocation7 + $0x30] sm:$0xff]
    %v490 = vld [vmem:[#allocation7 + $0x38] sm:$0xff]
    %v491 = vld [vmem:[#allocation7 + $0x40] sm:$0xff]
    %v492 = vld [vmem:[#allocation7 + $0x48] sm:$0xff]
    %v493 = vld [vmem:[#allocation7 + $0x50] sm:$0xff]
    %v494 = vld [vmem:[#allocation7 + $0x58] sm:$0xff]
    %v495 = vld [vmem:[#allocation7 + $0x60] sm:$0xff]
    %v496 = vld [vmem:[#allocation7 + $0x68] sm:$0xff]
    %v497 = vld [vmem:[#allocation7 + $0x70] sm:$0xff]
    %v498 = vld [vmem:[#allocation7 + $0x78] sm:$0xff]
    %v499 = vld [vmem:[#allocation9] sm:$0xff]
    %v500 = vld [vmem:[#allocation9 + $0x8] sm:$0xff]
    %v501 = vld [vmem:[#allocation9 + $0x10] sm:$0xff]
    %v502 = vld [vmem:[#allocation9 + $0x18] sm:$0xff]
    %v503 = vld [vmem:[#allocation9 + $0x20] sm:$0xff]
    %v504 = vld [vmem:[#allocation9 + $0x28] sm:$0xff]
    %v505 = vld [vmem:[#allocation9 + $0x30] sm:$0xff]
    %v506 = vld [vmem:[#allocation9 + $0x38] sm:$0xff]
    %v507 = vld [vmem:[#allocation9 + $0x40] sm:$0xff]
    %v508 = vld [vmem:[#allocation9 + $0x48] sm:$0xff]
    %v509 = vld [vmem:[#allocation9 + $0x50] sm:$0xff]
    %v510 = vld [vmem:[#allocation9 + $0x58] sm:$0xff]
    %v511 = vld [vmem:[#allocation9 + $0x60] sm:$0xff]
    %v512 = vld [vmem:[#allocation9 + $0x68] sm:$0xff]
    %v513 = vld [vmem:[#allocation9 + $0x70] sm:$0xff]
    %v514 = vld [vmem:[#allocation9 + $0x78] sm:$0xff]
    %515 = vmatprep.subr.mxu0 0.0
    %516 = vmatpush1.msra.mxu0 %v514
    %517 = vmatprep.subr.mxu0 0.0
    %518 = vmatpush1.msra.mxu0 %v513
    %519 = vmatprep.subr.mxu0 0.0
    %520 = vmatpush1.msra.mxu0 %v512
    %521 = vmatprep.subr.mxu0 0.0
    %522 = vmatpush1.msra.mxu0 %v511
    %523 = vmatprep.subr.mxu0 0.0
    %524 = vmatpush1.msra.mxu0 %v510
    %525 = vmatprep.subr.mxu0 0.0
    %526 = vmatpush1.msra.mxu0 %v509
    %527 = vmatprep.subr.mxu0 0.0
    %528 = vmatpush1.msra.mxu0 %v508
    %529 = vmatprep.subr.mxu0 0.0
    %530 = vmatpush1.msra.mxu0 %v507
    %531 = vmatprep.subr.mxu0 0.0
    %532 = vmatpush1.msra.mxu0 %v506
    %533 = vmatprep.subr.mxu0 0.0
    %534 = vmatpush1.msra.mxu0 %v505
    %535 = vmatprep.subr.mxu0 0.0
    %536 = vmatpush1.msra.mxu0 %v504
    %537 = vmatprep.subr.mxu0 0.0
    %538 = vmatpush1.msra.mxu0 %v503
    %539 = vmatprep.subr.mxu0 0.0
    %540 = vmatpush1.msra.mxu0 %v502
    %541 = vmatprep.subr.mxu0 0.0
    %542 = vmatpush1.msra.mxu0 %v501
    %543 = vmatprep.subr.mxu0 0.0
    %544 = vmatpush1.msra.mxu0 %v500
    %545 = vmatprep.subr.mxu0 0.0
    %546 = vmatpush1.msra.mxu0 %v499
    %547 = vmatprep.subr.mxu0 0.0
    %548 = vmatpush2.msra.mxu0 0.0
    %549 = vmatprep.subr.mxu0 0.0
    %550 = vmatpush2.msra.mxu0 0.0
    %551 = vmatprep.subr.mxu0 0.0
    %552 = vmatpush2.msra.mxu0 0.0
    %553 = vmatprep.subr.mxu0 0.0
    %554 = vmatpush2.msra.mxu0 0.0
    %555 = vmatprep.subr.mxu0 0.0
    %556 = vmatpush2.msra.mxu0 0.0
    %557 = vmatprep.subr.mxu0 0.0
    %558 = vmatpush2.msra.mxu0 0.0
    %559 = vmatprep.subr.mxu0 0.0
    %560 = vmatpush2.msra.mxu0 0.0
    %561 = vmatprep.subr.mxu0 0.0
    %562 = vmatpush2.msra.mxu0 0.0
    %563 = vmatprep.subr.mxu0 0.0
    %564 = vmatpush2.msra.mxu0 0.0
    %565 = vmatprep.subr.mxu0 0.0
    %566 = vmatpush2.msra.mxu0 0.0
    %567 = vmatprep.subr.mxu0 0.0
    %568 = vmatpush2.msra.mxu0 0.0
    %569 = vmatprep.subr.mxu0 0.0
    %570 = vmatpush2.msra.mxu0 0.0
    %571 = vmatprep.subr.mxu0 0.0
    %572 = vmatpush2.msra.mxu0 0.0
    %573 = vmatprep.subr.mxu0 0.0
    %574 = vmatpush2.msra.mxu0 0.0
    %575 = vmatprep.subr.mxu0 0.0
    %576 = vmatpush2.msra.mxu0 0.0
    %577 = vmatprep.subr.mxu0 0.0
    %578 = vmatpush2.msra.mxu0 0.0
    %579 = vmatprep.mubr.f32.mxu0 0.0
    %580 = vmatmul.mubr.f32.gmra.mxu0 %v482
    %v581 = vpop.f32.mrf.mxu0
    %v582 = vadd.f32 0.0, %v581
    %v583 = vpop.f32.mrf.mxu0
    %584 = vdwg.mxu0
    %585 = vmatprep.subr.mxu0 0.0
    %586 = vmatpush1.msra.mxu0 %v498
    %587 = vmatprep.subr.mxu0 0.0
    %588 = vmatpush1.msra.mxu0 %v497
    %589 = vmatprep.subr.mxu0 0.0
    %590 = vmatpush1.msra.mxu0 %v496
    %591 = vmatprep.subr.mxu0 0.0
    %592 = vmatpush1.msra.mxu0 %v495
    %593 = vmatprep.subr.mxu0 0.0
    %594 = vmatpush1.msra.mxu0 %v494
    %595 = vmatprep.subr.mxu0 0.0
    %596 = vmatpush1.msra.mxu0 %v493
    %597 = vmatprep.subr.mxu0 0.0
    %598 = vmatpush1.msra.mxu0 %v492
    %599 = vmatprep.subr.mxu0 0.0
    %600 = vmatpush1.msra.mxu0 %v491
    %601 = vmatprep.subr.mxu0 0.0
    %602 = vmatpush1.msra.mxu0 %v490
    %603 = vmatprep.subr.mxu0 0.0
    %604 = vmatpush1.msra.mxu0 %v489
    %605 = vmatprep.subr.mxu0 0.0
    %606 = vmatpush1.msra.mxu0 %v488
    %607 = vmatprep.subr.mxu0 0.0
    %608 = vmatpush1.msra.mxu0 %v487
    %609 = vmatprep.subr.mxu0 0.0
    %610 = vmatpush1.msra.mxu0 %v486
    %611 = vmatprep.subr.mxu0 0.0
    %612 = vmatpush1.msra.mxu0 %v485
    %613 = vmatprep.subr.mxu0 0.0
    %614 = vmatpush1.msra.mxu0 %v484
    %615 = vmatprep.subr.mxu0 0.0
    %616 = vmatpush1.msra.mxu0 %v483
    %617 = vmatprep.subr.mxu0 0.0
    %618 = vmatpush2.msra.mxu0 0.0
    %619 = vmatprep.subr.mxu0 0.0
    %620 = vmatpush2.msra.mxu0 0.0
    %621 = vmatprep.subr.mxu0 0.0
    %622 = vmatpush2.msra.mxu0 0.0
    %623 = vmatprep.subr.mxu0 0.0
    %624 = vmatpush2.msra.mxu0 0.0
    %625 = vmatprep.subr.mxu0 0.0
    %626 = vmatpush2.msra.mxu0 0.0
    %627 = vmatprep.subr.mxu0 0.0
    %628 = vmatpush2.msra.mxu0 0.0
    %629 = vmatprep.subr.mxu0 0.0
    %630 = vmatpush2.msra.mxu0 0.0
    %631 = vmatprep.subr.mxu0 0.0
    %632 = vmatpush2.msra.mxu0 0.0
    %633 = vmatprep.subr.mxu0 0.0
    %634 = vmatpush2.msra.mxu0 0.0
    %635 = vmatprep.subr.mxu0 0.0
    %636 = vmatpush2.msra.mxu0 0.0
    %637 = vmatprep.subr.mxu0 0.0
    %638 = vmatpush2.msra.mxu0 0.0
    %639 = vmatprep.subr.mxu0 0.0
    %640 = vmatpush2.msra.mxu0 0.0
    %641 = vmatprep.subr.mxu0 0.0
    %642 = vmatpush2.msra.mxu0 0.0
    %643 = vmatprep.subr.mxu0 0.0
    %644 = vmatpush2.msra.mxu0 0.0
    %645 = vmatprep.subr.mxu0 0.0
    %646 = vmatpush2.msra.mxu0 0.0
    %647 = vmatprep.subr.mxu0 0.0
    %648 = vmatpush2.msra.mxu0 0.0
    %649 = vmatprep.mubr.f32.mxu0 0.0
    %650 = vmatmul.mubr.f32.gmra.mxu0 %v388
    %v651 = vpop.f32.mrf.mxu0
    %v652 = vadd.f32 %v582, %v651
    %v653 = vpop.f32.mrf.mxu0
    %654 = vdwg.mxu0
    %v655 = vld [vmem:[%s9] sm:$0x1]
    %v657 = vlaneseq
    %v658 = vshrl.u32 %v657, 7
    %v659 = vsub.s32 0, %v658
    %v660 = vrot.slane %v655, %v659
    %v662 = vadd.f32 %v652, %v660
    %v663 = vmax.f32 %v662, 0.0
    %v664 = vld [vmem:[#allocation10] sm:$0xff]
    %v665 = vld [vmem:[#allocation10 + $0x8] sm:$0xff]
    %v666 = vld [vmem:[#allocation10 + $0x10] sm:$0xff]
    %v667 = vld [vmem:[#allocation10 + $0x18] sm:$0xff]
    %v668 = vld [vmem:[#allocation10 + $0x20] sm:$0xff]
    %v669 = vld [vmem:[#allocation10 + $0x28] sm:$0xff]
    %v670 = vld [vmem:[#allocation10 + $0x30] sm:$0xff]
    %v671 = vld [vmem:[#allocation10 + $0x38] sm:$0xff]
    %v672 = vld [vmem:[#allocation10 + $0x40] sm:$0xff]
    %v673 = vld [vmem:[#allocation10 + $0x48] sm:$0xff]
    %v674 = vld [vmem:[#allocation10 + $0x50] sm:$0xff]
    %v675 = vld [vmem:[#allocation10 + $0x58] sm:$0xff]
    %v676 = vld [vmem:[#allocation10 + $0x60] sm:$0xff]
    %v677 = vld [vmem:[#allocation10 + $0x68] sm:$0xff]
    %v678 = vld [vmem:[#allocation10 + $0x70] sm:$0xff]
    %v679 = vld [vmem:[#allocation10 + $0x78] sm:$0xff]
    %v680 = vld [vmem:[%s11] sm:$0x1]
    %v682 = vlaneseq
    %v683 = vshrl.u32 %v682, 7
    %v684 = vsub.s32 0, %v683
    %v685 = vrot.slane %v680, %v684
    %687 = vmatprep.subr.mxu0 0.0
    %688 = vmatpush1.msra.mxu0 %v679
    %689 = vmatprep.subr.mxu0 0.0
    %690 = vmatpush1.msra.mxu0 %v678
    %691 = vmatprep.subr.mxu0 0.0
    %692 = vmatpush1.msra.mxu0 %v677
    %693 = vmatprep.subr.mxu0 0.0
    %694 = vmatpush1.msra.mxu0 %v676
    %695 = vmatprep.subr.mxu0 0.0
    %696 = vmatpush1.msra.mxu0 %v675
    %697 = vmatprep.subr.mxu0 0.0
    %698 = vmatpush1.msra.mxu0 %v674
    %699 = vmatprep.subr.mxu0 0.0
    %700 = vmatpush1.msra.mxu0 %v673
    %701 = vmatprep.subr.mxu0 0.0
    %702 = vmatpush1.msra.mxu0 %v672
    %703 = vmatprep.subr.mxu0 0.0
    %704 = vmatpush1.msra.mxu0 %v671
    %705 = vmatprep.subr.mxu0 0.0
    %706 = vmatpush1.msra.mxu0 %v670
    %707 = vmatprep.subr.mxu0 0.0
    %708 = vmatpush1.msra.mxu0 %v669
    %709 = vmatprep.subr.mxu0 0.0
    %710 = vmatpush1.msra.mxu0 %v668
    %711 = vmatprep.subr.mxu0 0.0
    %712 = vmatpush1.msra.mxu0 %v667
    %713 = vmatprep.subr.mxu0 0.0
    %714 = vmatpush1.msra.mxu0 %v666
    %715 = vmatprep.subr.mxu0 0.0
    %716 = vmatpush1.msra.mxu0 %v665
    %717 = vmatprep.subr.mxu0 0.0
    %718 = vmatpush1.msra.mxu0 %v664
    %719 = vmatprep.subr.mxu0 0.0
    %720 = vmatpush2.msra.mxu0 0.0
    %721 = vmatprep.subr.mxu0 0.0
    %722 = vmatpush2.msra.mxu0 0.0
    %723 = vmatprep.subr.mxu0 0.0
    %724 = vmatpush2.msra.mxu0 0.0
    %725 = vmatprep.subr.mxu0 0.0
    %726 = vmatpush2.msra.mxu0 0.0
    %727 = vmatprep.subr.mxu0 0.0
    %728 = vmatpush2.msra.mxu0 0.0
    %729 = vmatprep.subr.mxu0 0.0
    %730 = vmatpush2.msra.mxu0 0.0
    %731 = vmatprep.subr.mxu0 0.0
    %732 = vmatpush2.msra.mxu0 0.0
    %733 = vmatprep.subr.mxu0 0.0
    %734 = vmatpush2.msra.mxu0 0.0
    %735 = vmatprep.subr.mxu0 0.0
    %736 = vmatpush2.msra.mxu0 0.0
    %737 = vmatprep.subr.mxu0 0.0
    %738 = vmatpush2.msra.mxu0 0.0
    %739 = vmatprep.subr.mxu0 0.0
    %740 = vmatpush2.msra.mxu0 0.0
    %741 = vmatprep.subr.mxu0 0.0
    %742 = vmatpush2.msra.mxu0 0.0
    %743 = vmatprep.subr.mxu0 0.0
    %744 = vmatpush2.msra.mxu0 0.0
    %745 = vmatprep.subr.mxu0 0.0
    %746 = vmatpush2.msra.mxu0 0.0
    %747 = vmatprep.subr.mxu0 0.0
    %748 = vmatpush2.msra.mxu0 0.0
    %749 = vmatprep.subr.mxu0 0.0
    %750 = vmatpush2.msra.mxu0 0.0
    %751 = vmatprep.mubr.f32.mxu0 0.0
    %752 = vmatmul.mubr.f32.gmra.mxu0 %v663
    %v753 = vpop.f32.mrf.mxu0
    %v754 = vadd.f32 %v685, %v753
    %v755 = vpop.f32.mrf.mxu0
    %756 = vdwg.mxu0
    %757 = vst [vmem:[%s12] sm:$0xff] %v754
    // Predicated region
    $region74: #{cnn_forward.1} parent=1 // pred_check
      _
    $region75: #{cnn_forward.1} parent=1 // pred_check_branch
      %759 = sbr.rel (0) target = $region77
    $region76: #{cnn_forward.1} parent=1 // pred_region
      _
    $region77: #{cnn_forward.1} parent=1 // pred_fallthru
      _
    // Predicated region
    $region78: #{cnn_forward.1} parent=1 // pred_check
      _
    $region79: #{cnn_forward.1} parent=1 // pred_check_branch
      %761 = sbr.rel (0) target = $region81
    $region80: #{cnn_forward.1} parent=1 // pred_region
      _
    $region81: #{cnn_forward.1} parent=1 // pred_fallthru
      _
    %762 = vsyncpa [#allocation3], 1
    %763 = vsyncpa [#allocation5], 1
    %764 = vsyncpa [#allocation8], 1
    %765 = vsyncpa [#allocation11], 1

</llo_original>
